<compile_context>
chip_gen: v7x
topology: tpu7x:2x2x1
jax: 0.10.0
libtpu: 0.0.40
codegen_flags: <defaults>
</compile_context>

<pallas_src>
import jax
import jax.numpy as jnp
from jax.experimental import pallas as pl
from jax.experimental.pallas import tpu as pltpu


def _discriminator_kernel(xT_ref, w1_ref, b1_ref, w2_ref, b2_ref,
                          w3_ref, b3_ref, o_ref):
    # xT_ref: (D, tile_b) bf16, batch on lanes. Weights pre-transposed (out, in).
    xT = xT_ref[...]                                                   # bf16
    h1 = jnp.dot(w1_ref[...], xT,
                 preferred_element_type=jnp.float32) + b1_ref[...]    # (H, tile_b) f32
    h2 = jnp.dot(w2_ref[...], h1.astype(jnp.bfloat16),
                 preferred_element_type=jnp.float32) + b2_ref[...]    # (H, tile_b) f32
    # Final H->1 projection off the MXU: multiply + sublane reduce (VPU/XLU).
    logits = jnp.sum(h2 * w3_ref[...], axis=0, keepdims=True) + b3_ref[...]  # (1, tile_b)
    o_ref[...] = jax.nn.sigmoid(logits).astype(o_ref.dtype)


def discriminator_forward(x, params, *, tile_b=128):
    """x: [B, D] float32.  params: dict produced by init_params()."""
    B, D = x.shape
    H = params["w1"].shape[0]

    n_tiles = pl.cdiv(B, tile_b)          # >=2 tiles on realistic batches -> both v7x TCs busy
    B_pad = n_tiles * tile_b

    xT = x.astype(jnp.bfloat16).T         # (D, B) — layout plumbing done in XLA
    if B_pad != B:
        xT = jnp.pad(xT, ((0, 0), (0, B_pad - B)))

    weight_bytes = sum(int(v.size) * v.dtype.itemsize for v in params.values())
    flops = 2 * B_pad * (D * H + H * H + H)
    bytes_accessed = int(xT.size) * 2 + weight_bytes + B_pad * 4
    cost = pl.CostEstimate(flops=flops, transcendentals=B_pad,
                           bytes_accessed=bytes_accessed)

    # Resident weights + double-buffered x/out tiles + f32 activations, with headroom.
    act_bytes = 8 * tile_b * (D + 2 * H + 2) * 4
    vmem_limit = int(min(64 * 1024 * 1024,
                         max(16 * 1024 * 1024, 2 * weight_bytes + act_bytes)))

    full = lambda i: (0, 0)
    out = pl.pallas_call(
        _discriminator_kernel,
        out_shape=jax.ShapeDtypeStruct((1, B_pad), jnp.float32),
        grid_spec=pltpu.PrefetchScalarGridSpec(
            num_scalar_prefetch=0,
            grid=(n_tiles,),
            in_specs=[
                pl.BlockSpec((D, tile_b), lambda i: (0, i)),   # x^T tile (batch on lanes)
                pl.BlockSpec((H, D), full),                    # w1 (bf16, resident)
                pl.BlockSpec((H, 1), full),                    # b1 (f32)
                pl.BlockSpec((H, H), full),                    # w2 (bf16, resident)
                pl.BlockSpec((H, 1), full),                    # b2 (f32)
                pl.BlockSpec((H, 1), full),                    # w3 (f32 column, used on VPU)
                pl.BlockSpec((1, 1), full),                    # b3 (f32)
            ],
            out_specs=pl.BlockSpec((1, tile_b), lambda i: (0, i)),  # lane-dense output row
        ),
        compiler_params=pltpu.CompilerParams(
            dimension_semantics=("parallel",),
            vmem_limit_bytes=vmem_limit),
        cost_estimate=cost,
    )(xT, params["w1"], params["b1"], params["w2"], params["b2"],
      params["w3"], params["b3"])

    return out[0, :B].reshape(B, 1).astype(x.dtype)


def init_params(key, input_size, hidden_size):
    """nn.Linear-style init; matmul weights stored (out, in) in bf16 for the MXU."""
    k1, k2, k3, k4, k5, k6 = jax.random.split(key, 6)
    s1 = float(input_size) ** -0.5
    s2 = float(hidden_size) ** -0.5
    f32 = jnp.float32
    return {
        "w1": jax.random.uniform(k1, (hidden_size, input_size), f32, -s1, s1).astype(jnp.bfloat16),
        "b1": jax.random.uniform(k2, (hidden_size, 1), f32, -s1, s1),
        "w2": jax.random.uniform(k3, (hidden_size, hidden_size), f32, -s2, s2).astype(jnp.bfloat16),
        "b2": jax.random.uniform(k4, (hidden_size, 1), f32, -s2, s2),
        "w3": jax.random.uniform(k5, (hidden_size, 1), f32, -s2, s2),   # stays f32 (VPU path)
        "b3": jax.random.uniform(k6, (1, 1), f32, -s2, s2),
    }


def _reference(x, p):
    """Pure-JAX reference using the same bf16 matmul operands / f32 accumulation."""
    xb = x.astype(jnp.bfloat16)
    h1 = jnp.dot(xb, p["w1"].T, preferred_element_type=jnp.float32) + p["b1"][:, 0]
    h2 = jnp.dot(h1.astype(jnp.bfloat16), p["w2"].T,
                 preferred_element_type=jnp.float32) + p["b2"][:, 0]
    logits = h2 @ p["w3"] + p["b3"]
    return jax.nn.sigmoid(logits)


if __name__ == "__main__":
    key = jax.random.PRNGKey(0)
    kx, kp = jax.random.split(key)

    batch, input_size, hidden_size = 16, 32, 32
    x = jax.random.normal(kx, (batch, input_size), jnp.float32)
    params = init_params(kp, input_size, hidden_size)

    out = jax.block_until_ready(discriminator_forward(x, params))
    ref = jax.block_until_ready(_reference(x, params))

    assert out.shape == (batch, 1)
    assert bool(jnp.all(jnp.isfinite(out)))
    assert jnp.allclose(out, ref, atol=1e-4, rtol=1e-4), \
        float(jnp.max(jnp.abs(out - ref)))

    print("KERNEL_OK")
</pallas_src>

<mosaic_0001>
module attributes {stable_mosaic.version = 11 : i64} {
  func.func @_discriminator_kernel(%arg0: i32, %arg1: memref<32x128xbf16, #tpu.memory_space<vmem>>, %arg2: memref<32x32xbf16, #tpu.memory_space<vmem>>, %arg3: memref<32x1xf32, #tpu.memory_space<vmem>>, %arg4: memref<32x32xbf16, #tpu.memory_space<vmem>>, %arg5: memref<32x1xf32, #tpu.memory_space<vmem>>, %arg6: memref<32x1xf32, #tpu.memory_space<vmem>>, %arg7: memref<1x1xf32, #tpu.memory_space<vmem>>, %arg8: memref<1x128xf32, #tpu.memory_space<vmem>>) attributes {dimension_semantics = [#tpu.dimension_semantics<parallel>], iteration_bounds = array<i64: 1>, scalar_prefetch = 0 : i64, scratch_operands = 0 : i64, tpu.core_type = #tpu.core_type<tc>, window_params = [{transform_indices = @transform_0, window_bounds = array<i64: 32, 128>}, {pipeline_mode = #tpu.pipeline_mode<synchronous>, transform_indices = @transform_1, window_bounds = array<i64: 32, 32>}, {pipeline_mode = #tpu.pipeline_mode<synchronous>, transform_indices = @transform_2, window_bounds = array<i64: 32, 1>}, {pipeline_mode = #tpu.pipeline_mode<synchronous>, transform_indices = @transform_3, window_bounds = array<i64: 32, 32>}, {pipeline_mode = #tpu.pipeline_mode<synchronous>, transform_indices = @transform_4, window_bounds = array<i64: 32, 1>}, {pipeline_mode = #tpu.pipeline_mode<synchronous>, transform_indices = @transform_5, window_bounds = array<i64: 32, 1>}, {pipeline_mode = #tpu.pipeline_mode<synchronous>, transform_indices = @transform_6, window_bounds = array<i64: 1, 1>}, {transform_indices = @transform_7, window_bounds = array<i64: 1, 128>}]} {
    %c0 = arith.constant 0 : index
    %c0_0 = arith.constant 0 : index
    %0 = vector.load %arg1[%c0, %c0_0] : memref<32x128xbf16, #tpu.memory_space<vmem>>, vector<32x128xbf16>
    %c0_1 = arith.constant 0 : index
    %c0_2 = arith.constant 0 : index
    %1 = vector.load %arg2[%c0_1, %c0_2] : memref<32x32xbf16, #tpu.memory_space<vmem>>, vector<32x32xbf16>
    %cst = arith.constant dense<0.000000e+00> : vector<32x128xf32>
    %2 = tpu.matmul %1, %0, %cst {dimension_numbers = #tpu.dot_dimension_numbers<[1], [0], [0], [1], [0, 0, 1, 1], [], []>} : vector<32x32xbf16>, vector<32x128xbf16>, vector<32x128xf32> -> vector<32x128xf32>
    %c0_3 = arith.constant 0 : index
    %c0_4 = arith.constant 0 : index
    %3 = vector.load %arg3[%c0_3, %c0_4] : memref<32x1xf32, #tpu.memory_space<vmem>>, vector<32x1xf32>
    %4 = vector.broadcast %3 : vector<32x1xf32> to vector<32x128xf32>
    %5 = arith.addf %2, %4 : vector<32x128xf32>
    %c0_5 = arith.constant 0 : index
    %c0_6 = arith.constant 0 : index
    %6 = vector.load %arg4[%c0_5, %c0_6] : memref<32x32xbf16, #tpu.memory_space<vmem>>, vector<32x32xbf16>
    %7 = arith.truncf %5 : vector<32x128xf32> to vector<32x128xbf16>
    %cst_7 = arith.constant dense<0.000000e+00> : vector<32x128xf32>
    %8 = tpu.matmul %6, %7, %cst_7 {dimension_numbers = #tpu.dot_dimension_numbers<[1], [0], [0], [1], [0, 0, 1, 1], [], []>} : vector<32x32xbf16>, vector<32x128xbf16>, vector<32x128xf32> -> vector<32x128xf32>
    %c0_8 = arith.constant 0 : index
    %c0_9 = arith.constant 0 : index
    %9 = vector.load %arg5[%c0_8, %c0_9] : memref<32x1xf32, #tpu.memory_space<vmem>>, vector<32x1xf32>
    %10 = vector.broadcast %9 : vector<32x1xf32> to vector<32x128xf32>
    %11 = arith.addf %8, %10 : vector<32x128xf32>
    %c0_10 = arith.constant 0 : index
    %c0_11 = arith.constant 0 : index
    %12 = vector.load %arg6[%c0_10, %c0_11] : memref<32x1xf32, #tpu.memory_space<vmem>>, vector<32x1xf32>
    %13 = vector.broadcast %12 : vector<32x1xf32> to vector<32x128xf32>
    %14 = arith.mulf %11, %13 : vector<32x128xf32>
    %cst_12 = arith.constant dense<0.000000e+00> : vector<128xf32>
    %15 = vector.multi_reduction <add>, %14, %cst_12 [0] : vector<32x128xf32> to vector<128xf32>
    %16 = vector.shape_cast %15 : vector<128xf32> to vector<1x128xf32>
    %c0_13 = arith.constant 0 : index
    %c0_14 = arith.constant 0 : index
    %17 = vector.load %arg7[%c0_13, %c0_14] : memref<1x1xf32, #tpu.memory_space<vmem>>, vector<1x1xf32>
    %18 = vector.broadcast %17 : vector<1x1xf32> to vector<1x128xf32>
    %19 = arith.addf %16, %18 : vector<1x128xf32>
    %20 = arith.negf %19 : vector<1x128xf32>
    %21 = math.exp %20 : vector<1x128xf32>
    %cst_15 = arith.constant 1.000000e+00 : f32
    %22 = vector.broadcast %cst_15 : f32 to vector<1x128xf32>
    %23 = arith.addf %22, %21 : vector<1x128xf32>
    %24 = arith.divf %22, %23 : vector<1x128xf32>
    %c0_16 = arith.constant 0 : index
    %c0_17 = arith.constant 0 : index
    %25 = vector.load %arg8[%c0_16, %c0_17] : memref<1x128xf32, #tpu.memory_space<vmem>>, vector<1x128xf32>
    tpu.vector_store %arg8[%c0_16, %c0_17], %24 {strides = array<i32>} : memref<1x128xf32, #tpu.memory_space<vmem>>, vector<1x128xf32>,
    return
  }
  func.func @transform_0(%arg0: i32) -> (i32, i32) {
    %c0_i32 = arith.constant 0 : i32
    %c0_i32_0 = arith.constant 0 : i32
    return %c0_i32, %arg0 : i32, i32
  }
  func.func @transform_1(%arg0: i32) -> (i32, i32) {
    %c0_i32 = arith.constant 0 : i32
    %c0_i32_0 = arith.constant 0 : i32
    %c0_i32_1 = arith.constant 0 : i32
    return %c0_i32, %c0_i32_0 : i32, i32
  }
  func.func @transform_2(%arg0: i32) -> (i32, i32) {
    %c0_i32 = arith.constant 0 : i32
    %c0_i32_0 = arith.constant 0 : i32
    %c0_i32_1 = arith.constant 0 : i32
    return %c0_i32, %c0_i32_0 : i32, i32
  }
  func.func @transform_3(%arg0: i32) -> (i32, i32) {
    %c0_i32 = arith.constant 0 : i32
    %c0_i32_0 = arith.constant 0 : i32
    %c0_i32_1 = arith.constant 0 : i32
    return %c0_i32, %c0_i32_0 : i32, i32
  }
  func.func @transform_4(%arg0: i32) -> (i32, i32) {
    %c0_i32 = arith.constant 0 : i32
    %c0_i32_0 = arith.constant 0 : i32
    %c0_i32_1 = arith.constant 0 : i32
    return %c0_i32, %c0_i32_0 : i32, i32
  }
  func.func @transform_5(%arg0: i32) -> (i32, i32) {
    %c0_i32 = arith.constant 0 : i32
    %c0_i32_0 = arith.constant 0 : i32
    %c0_i32_1 = arith.constant 0 : i32
    return %c0_i32, %c0_i32_0 : i32, i32
  }
  func.func @transform_6(%arg0: i32) -> (i32, i32) {
    %c0_i32 = arith.constant 0 : i32
    %c0_i32_0 = arith.constant 0 : i32
    %c0_i32_1 = arith.constant 0 : i32
    return %c0_i32, %c0_i32_0 : i32, i32
  }
  func.func @transform_7(%arg0: i32) -> (i32, i32) {
    %c0_i32 = arith.constant 0 : i32
    %c0_i32_0 = arith.constant 0 : i32
    return %c0_i32, %arg0 : i32, i32
  }
}

</mosaic_0001>

<llo_original>
// kernel: tpu_custom_call.1
$region0: #{tpu_custom_call.1}
  #allocation0 [shape = 'u32[]', space=smem, size = 0x4, offset = 0x4, fixed_abs, tag = 'smem constant byte address 0x4 - core index']
  #allocation1 [shape = 'u32[144,128]{1,0:T(1,128)}', space=vmem, size = 0x12000, scoped, tag = 'internal scratch']
  #allocation2 [shape = 'f32[1,1]{1,0:T(1,128)S(1)}', space=vmem, size = 0x200, scoped, tag = 'scoped memory for tpu_custom_call.1']
  %s0 = inlined_call_operand.vmem [shape: bf16[32,128], index: 0, kind: input, shape index: {}]
  %s1 = inlined_call_operand.vmem [shape: bf16[32,32], index: 1, kind: input, shape index: {}]
  %s2 = inlined_call_operand.vmem [shape: f32[32,1], index: 2, kind: input, shape index: {}]
  %s3 = inlined_call_operand.vmem [shape: bf16[32,32], index: 3, kind: input, shape index: {}]
  %s4 = inlined_call_operand.vmem [shape: f32[32,1], index: 4, kind: input, shape index: {}]
  %s5 = inlined_call_operand.vmem [shape: f32[32,1], index: 5, kind: input, shape index: {}]
  %s6 = inlined_call_operand.<no memory space> [shape: f32[1,1], index: 6, kind: input, shape index: {}]
  %s7 = inlined_call_operand.hbm [shape: f32[1,128], index: 7, kind: output, shape index: {}]
  %s8 = sld [smem:[#allocation0]]
  $region38: #{tpu_custom_call.1} parent=0
    _
  %s10 = ssub.s32 1, %s8
  %s11 = scalar_select 0, %s10, %s8
  %v12 = vstv %s6
  %13 = vst [vmem:[#allocation2] sm:$0x1] %v12
  $region1: #{tpu_custom_call.1} parent=0
    #allocation3 [shape = 'u8[512]{0}', space=vmem, size = 0x400, scoped, tag = 'output window, operand 0, single buffered']
    #allocation4 [shape = 's32[1]{0}', space=sflag, size = 0x4, scoped, tag = 'scoped memory for tpu_custom_call.1']
    %14 = vsyncpa [#allocation4], 0
    // Predicated region
    $region2: #{tpu_custom_call.1} parent=1 // pred_check
      _
    $region3: #{tpu_custom_call.1} parent=1 // pred_check_branch
      %16 = sbr.rel (0) target = $region5
    $region4: #{tpu_custom_call.1} parent=1 // pred_region
      _
    $region5: #{tpu_custom_call.1} parent=1 // pred_fallthru
      _
    // Predicated region
    $region6: #{tpu_custom_call.1} parent=1 // pred_check
      _
    $region7: #{tpu_custom_call.1} parent=1 // pred_check_branch
      %18 = sbr.rel (0) target = $region9
    $region8: #{tpu_custom_call.1} parent=1 // pred_region
      _
    $region9: #{tpu_custom_call.1} parent=1 // pred_fallthru
      _
    // Predicated region
    $region10: #{tpu_custom_call.1} parent=1 // pred_check
      _
    $region11: #{tpu_custom_call.1} parent=1 // pred_check_branch
      %20 = sbr.rel (0) target = $region13
    $region12: #{tpu_custom_call.1} parent=1 // pred_region
      _
    $region13: #{tpu_custom_call.1} parent=1 // pred_fallthru
      _
    // Predicated region
    $region14: #{tpu_custom_call.1} parent=1 // pred_check
      _
    $region15: #{tpu_custom_call.1} parent=1 // pred_check_branch
      %22 = sbr.rel (0) target = $region17
    $region16: #{tpu_custom_call.1} parent=1 // pred_region
      _
    $region17: #{tpu_custom_call.1} parent=1 // pred_fallthru
      _
    // Predicated region
    $region18: #{tpu_custom_call.1} parent=1 // pred_check
      _
    $region19: #{tpu_custom_call.1} parent=1 // pred_check_branch
      %24 = sbr.rel (0) target = $region21
    $region20: #{tpu_custom_call.1} parent=1 // pred_region
      _
    $region21: #{tpu_custom_call.1} parent=1 // pred_fallthru
      _
    // Predicated region
    $region22: #{tpu_custom_call.1} parent=1 // pred_check
      _
    $region23: #{tpu_custom_call.1} parent=1 // pred_check_branch
      %26 = sbr.rel (0) target = $region25
    $region24: #{tpu_custom_call.1} parent=1 // pred_region
      _
    $region25: #{tpu_custom_call.1} parent=1 // pred_fallthru
      _
    // Predicated region
    $region26: #{tpu_custom_call.1} parent=1 // pred_check
      _
    $region27: #{tpu_custom_call.1} parent=1 // pred_check_branch
      %28 = sbr.rel (0) target = $region29
    $region28: #{tpu_custom_call.1} parent=1 // pred_region
      _
    $region29: #{tpu_custom_call.1} parent=1 // pred_fallthru
      _
    %v30 = vld [vmem:[%s0] sm:$0xf]
    %v31 = vld [vmem:[%s0 + $0x4] sm:$0xf]
    %v32 = vld [vmem:[%s0 + $0x8] sm:$0xf]
    %v33 = vld [vmem:[%s0 + $0xc] sm:$0xf]
    %v34 = vld [vmem:[%s1] sm:$0xf]
    %v35 = vld [vmem:[%s1 + $0x4] sm:$0xf]
    %v36 = vld [vmem:[%s1 + $0x8] sm:$0xf]
    %v37 = vld [vmem:[%s1 + $0xc] sm:$0xf]
    %v38 = vld [vmem:[%s2] sm:$0xff]
    %v39 = vld [vmem:[%s2 + $0x8] sm:$0xff]
    %v40 = vld [vmem:[%s2 + $0x10] sm:$0xff]
    %v41 = vld [vmem:[%s2 + $0x18] sm:$0xff]
    %43 = vset.pattern.permute.xlu0 0
    %44 = vperm.xlu0 %43, %v38
    %v45 = vpop.permute.xlu0 %44
    %48 = vset.pattern.permute.xlu0 0
    %49 = vperm.xlu0 %48, %v39
    %v50 = vpop.permute.xlu0 %49
    %53 = vset.pattern.permute.xlu0 0
    %54 = vperm.xlu0 %53, %v40
    %v55 = vpop.permute.xlu0 %54
    %58 = vset.pattern.permute.xlu0 0
    %59 = vperm.xlu0 %58, %v41
    %v60 = vpop.permute.xlu0 %59
    %v66 = vunpack.c.l.b16 %v34
    %v67 = vunpack.c.l.b16 %v35
    %v68 = vunpack.c.l.b16 %v36
    %v69 = vunpack.c.l.b16 %v37
    %v70 = vpack.c.b16 %v67, %v66
    %v71 = vpack.c.b16 %v69, %v68
    %v76 = vunpack.c.l.b16 %v30
    %v77 = vunpack.c.l.b16 %v31
    %v78 = vunpack.c.l.b16 %v32
    %v79 = vunpack.c.l.b16 %v33
    %v80 = vpack.c.b16 %v77, %v76
    %v81 = vpack.c.b16 %v79, %v78
    %vm84 = vcmask 261120
    %v86 = vsel %vm84, %v70, 0
    %v89 = vsel %vm84, %v71, 0
    %91 = vmatprep.subr.bf16.mxu0 0
    %92 = vmatpush1.bf16.msra.mxu0 %v80
    %93 = vmatprep.subr.bf16.mxu0 0
    %94 = vmatpush1.bf16.msra.mxu0 %v81
    %95 = vmatprep.subr.bf16.mxu0 0
    %96 = vmatpush1.bf16.msra.mxu0 0
    %97 = vmatprep.subr.bf16.mxu0 0
    %98 = vmatpush1.bf16.msra.mxu0 0
    %99 = vmatprep.subr.bf16.mxu0 0
    %100 = vmatpush1.bf16.msra.mxu0 0
    %101 = vmatprep.subr.bf16.mxu0 0
    %102 = vmatpush1.bf16.msra.mxu0 0
    %103 = vmatprep.subr.bf16.mxu0 0
    %104 = vmatpush1.bf16.msra.mxu0 0
    %105 = vmatprep.subr.bf16.mxu0 0
    %106 = vmatpush1.bf16.msra.mxu0 0
    %107 = vmatprep.subr.bf16.mxu0 0
    %108 = vmatpush1.bf16.msra.mxu0 0
    %109 = vmatprep.subr.bf16.mxu0 0
    %110 = vmatpush1.bf16.msra.mxu0 0
    %111 = vmatprep.subr.bf16.mxu0 0
    %112 = vmatpush1.bf16.msra.mxu0 0
    %113 = vmatprep.subr.bf16.mxu0 0
    %114 = vmatpush1.bf16.msra.mxu0 0
    %115 = vmatprep.subr.bf16.mxu0 0
    %116 = vmatpush1.bf16.msra.mxu0 0
    %117 = vmatprep.subr.bf16.mxu0 0
    %118 = vmatpush1.bf16.msra.mxu0 0
    %119 = vmatprep.subr.bf16.mxu0 0
    %120 = vmatpush1.bf16.msra.mxu0 0
    %121 = vmatprep.subr.bf16.mxu0 0
    %122 = vmatpush1.bf16.msra.mxu0 0
    %123 = vmatprep.mubr.bf16.mxu0 0
    %124 = vmatmul.mubr.bf16.gmra.mrb[0].mxu0 %v86
    %v125 = vpop.f32.mrb[0].mxu0
    %v126 = vadd.f32 %v45, %v125
    %v127 = vpop.f32.mrb[0].mxu0
    %v128 = vpop.f32.mrb[0].mxu0
    %v129 = vadd.f32 %v50, %v128
    %v130 = vpop.f32.mrb[0].mxu0
    %131 = vmatprep.mubr.bf16.mxu0 0
    %132 = vmatmul.mubr.bf16.gmra.mrb[0].mxu0 %v89
    %v133 = vpop.f32.mrb[0].mxu0
    %v134 = vadd.f32 %v55, %v133
    %v135 = vpop.f32.mrb[0].mxu0
    %v136 = vpop.f32.mrb[0].mxu0
    %v137 = vadd.f32 %v60, %v136
    %v138 = vpop.f32.mrb[0].mxu0
    %139 = vdwg.mxu0
    %v140 = vld [vmem:[%s3] sm:$0xf]
    %v141 = vld [vmem:[%s3 + $0x4] sm:$0xf]
    %v142 = vld [vmem:[%s3 + $0x8] sm:$0xf]
    %v143 = vld [vmem:[%s3 + $0xc] sm:$0xf]
    %v144 = vpack.c.bf16 %v129, %v126
    %v145 = vpack.c.bf16 %v137, %v134
    %v146 = vld [vmem:[%s4] sm:$0xff]
    %v147 = vld [vmem:[%s4 + $0x8] sm:$0xff]
    %v148 = vld [vmem:[%s4 + $0x10] sm:$0xff]
    %v149 = vld [vmem:[%s4 + $0x18] sm:$0xff]
    %151 = vset.pattern.permute.xlu0 0
    %152 = vperm.xlu0 %151, %v146
    %v153 = vpop.permute.xlu0 %152
    %156 = vset.pattern.permute.xlu0 0
    %157 = vperm.xlu0 %156, %v147
    %v158 = vpop.permute.xlu0 %157
    %161 = vset.pattern.permute.xlu0 0
    %162 = vperm.xlu0 %161, %v148
    %v163 = vpop.permute.xlu0 %162
    %166 = vset.pattern.permute.xlu0 0
    %167 = vperm.xlu0 %166, %v149
    %v168 = vpop.permute.xlu0 %167
    %v174 = vunpack.c.l.b16 %v140
    %v175 = vunpack.c.l.b16 %v141
    %v176 = vunpack.c.l.b16 %v142
    %v177 = vunpack.c.l.b16 %v143
    %v178 = vpack.c.b16 %v175, %v174
    %v179 = vpack.c.b16 %v177, %v176
    %v181 = vsel %vm84, %v178, 0
    %v184 = vsel %vm84, %v179, 0
    %186 = vmatprep.subr.bf16.mxu0 0
    %187 = vmatpush1.bf16.msra.mxu0 %v144
    %188 = vmatprep.subr.bf16.mxu0 0
    %189 = vmatpush1.bf16.msra.mxu0 %v145
    %190 = vmatprep.subr.bf16.mxu0 0
    %191 = vmatpush1.bf16.msra.mxu0 0
    %192 = vmatprep.subr.bf16.mxu0 0
    %193 = vmatpush1.bf16.msra.mxu0 0
    %194 = vmatprep.subr.bf16.mxu0 0
    %195 = vmatpush1.bf16.msra.mxu0 0
    %196 = vmatprep.subr.bf16.mxu0 0
    %197 = vmatpush1.bf16.msra.mxu0 0
    %198 = vmatprep.subr.bf16.mxu0 0
    %199 = vmatpush1.bf16.msra.mxu0 0
    %200 = vmatprep.subr.bf16.mxu0 0
    %201 = vmatpush1.bf16.msra.mxu0 0
    %202 = vmatprep.subr.bf16.mxu0 0
    %203 = vmatpush1.bf16.msra.mxu0 0
    %204 = vmatprep.subr.bf16.mxu0 0
    %205 = vmatpush1.bf16.msra.mxu0 0
    %206 = vmatprep.subr.bf16.mxu0 0
    %207 = vmatpush1.bf16.msra.mxu0 0
    %208 = vmatprep.subr.bf16.mxu0 0
    %209 = vmatpush1.bf16.msra.mxu0 0
    %210 = vmatprep.subr.bf16.mxu0 0
    %211 = vmatpush1.bf16.msra.mxu0 0
    %212 = vmatprep.subr.bf16.mxu0 0
    %213 = vmatpush1.bf16.msra.mxu0 0
    %214 = vmatprep.subr.bf16.mxu0 0
    %215 = vmatpush1.bf16.msra.mxu0 0
    %216 = vmatprep.subr.bf16.mxu0 0
    %217 = vmatpush1.bf16.msra.mxu0 0
    %218 = vmatprep.mubr.bf16.mxu0 0
    %219 = vmatmul.mubr.bf16.gmra.mrb[0].mxu0 %v181
    %v220 = vpop.f32.mrb[0].mxu0
    %v221 = vadd.f32 %v153, %v220
    %v222 = vpop.f32.mrb[0].mxu0
    %v223 = vpop.f32.mrb[0].mxu0
    %v224 = vadd.f32 %v158, %v223
    %v225 = vpop.f32.mrb[0].mxu0
    %226 = vmatprep.mubr.bf16.mxu0 0
    %227 = vmatmul.mubr.bf16.gmra.mrb[0].mxu0 %v184
    %v228 = vpop.f32.mrb[0].mxu0
    %v229 = vadd.f32 %v163, %v228
    %v230 = vpop.f32.mrb[0].mxu0
    %v231 = vpop.f32.mrb[0].mxu0
    %v232 = vadd.f32 %v168, %v231
    %v233 = vpop.f32.mrb[0].mxu0
    %234 = vdwg.mxu0
    %v235 = vld [vmem:[%s5] sm:$0xff]
    %v236 = vld [vmem:[%s5 + $0x8] sm:$0xff]
    %v237 = vld [vmem:[%s5 + $0x10] sm:$0xff]
    %v238 = vld [vmem:[%s5 + $0x18] sm:$0xff]
    %240 = vset.pattern.permute.xlu0 0
    %241 = vperm.xlu0 %240, %v235
    %v242 = vpop.permute.xlu0 %241
    %245 = vset.pattern.permute.xlu0 0
    %246 = vperm.xlu0 %245, %v236
    %v247 = vpop.permute.xlu0 %246
    %250 = vset.pattern.permute.xlu0 0
    %251 = vperm.xlu0 %250, %v237
    %v252 = vpop.permute.xlu0 %251
    %255 = vset.pattern.permute.xlu0 0
    %256 = vperm.xlu0 %255, %v238
    %v257 = vpop.permute.xlu0 %256
    %v259 = vmul.f32 %v221, %v242
    %v260 = vmul.f32 %v224, %v247
    %v261 = vmul.f32 %v229, %v252
    %v262 = vmul.f32 %v232, %v257
    %v263 = vadd.f32 %v259, %v260
    %v264 = vadd.f32 %v263, %v261
    %v265 = vadd.f32 %v264, %v262
    %v266 = vrot.slane %v265, 4
    %v267 = vadd.f32 %v265, %v266
    %v268 = vrot.slane %v267, 2
    %v269 = vadd.f32 %v267, %v268
    %v270 = vrot.slane %v269, 1
    %v271 = vadd.f32 %v269, %v270
    %v272 = vld [vmem:[#allocation2] sm:$0x1]
    %274 = vset.pattern.permute.xlu0 0
    %275 = vperm.xlu0 %274, %v272
    %v276 = vpop.permute.xlu0 %275
    %v278 = vlaneseq
    %v279 = vshrl.u32 %v278, 7
    %v280 = vsub.s32 0, %v279
    %v281 = vrot.slane %v276, %v280
    %v282 = vadd.f32 %v271, %v281
    %v283 = vxor.u32 %v282, 2147483648
    %v284 = vmul.f32 %v283, 1.442695
    %v285 = vpow.pop %v284
    %v286 = vadd.f32 %v285, 1.0
    %v287 = vrcp.pop %v286
    %v288 = vmul.f32 1.0, %v287
    %289 = vst [vmem:[#allocation3] sm:$0x1] %v288
    // Predicated region
    $region30: #{tpu_custom_call.1} parent=1 // pred_check
      _
    $region31: #{tpu_custom_call.1} parent=1 // pred_check_branch
      %291 = sbr.rel (0) target = $region33
    $region32: #{tpu_custom_call.1} parent=1 // pred_region
      %s293 = ssub.s32 16, 16
      %294 = vsyncadd [#allocation4], %s293
      %s296 = sshll.u32 [#allocation3], 4
      %s297 = int_to_ptr.vmem [resolvable:$true] %s296
      %299 = dma.vmem_to_hbm [thread:$0]  %s297, 16, %s7, [#allocation4]
    $region33: #{tpu_custom_call.1} parent=1 // pred_fallthru
      _
    // Predicated region
    $region34: #{tpu_custom_call.1} parent=1 // pred_check
      _
    $region35: #{tpu_custom_call.1} parent=1 // pred_check_branch
      %301 = sbr.rel (0) target = $region37
    $region36: #{tpu_custom_call.1} parent=1 // pred_region
      %302 = dma.done [#allocation4], 16
    $region37: #{tpu_custom_call.1} parent=1 // pred_fallthru
      _
    %303 = vsyncpa [#allocation4], 1

</llo_original>
